<compile_context>
chip_gen: v7x
topology: tpu7x:2x2x1
jax: 0.10.0
libtpu: 0.0.40
codegen_flags: <defaults>
</compile_context>

<pallas_src>
import functools

import jax
import jax.numpy as jnp
from jax import lax
from jax.experimental import pallas as pl
from jax.experimental.pallas import tpu as pltpu


def residual_block_kernel(
    x_ref,       # (1, Cin, P)      f32   flattened NCHW image
    mask_ref,    # (9, P)           f32   0/1 border masks per 3x3 tap
    w1_ref,      # (2*Cout, 9*Cin)  bf16  conv1(+BN1) rows | shortcut 1x1(+BNsc) rows
    b1_ref,      # (2*Cout, 1)      f32
    w2_ref,      # (Cout, 9*Cout)   bf16  conv2(+BN2)
    b2_ref,      # (Cout, 1)        f32
    wse1_ref,    # (Cout, Cred)     f32   SE fc1 weight (Cout-major)
    bse1_ref,    # (1, Cred)        f32
    wse2_ref,    # (Cout, Cred)     f32   SE fc2 weight (transposed)
    bse2_ref,    # (Cout, 1)        f32
    out_ref,     # (1, Cout, P)     f32   lane-dense output (NCHW flattened)
    *, H, W, Cin, Cout,
):
    P = H * W
    taps = [(kh - 1, kw - 1) for kh in range(3) for kw in range(3)]

    def im2col_rows(xf):
        # xf: (C, P) f32.  For tap t with offset (dh, dw), rows t*C:(t+1)*C of
        # the result hold xf shifted by off = dh*W + dw along the flattened
        # spatial (lane) axis, with out-of-image positions zeroed by the
        # precomputed mask (realizes the SAME zero padding).  Rolls are XLU
        # lane rotations (roll(x, s)[p] == x[(p - s) % P], jnp.roll semantics),
        # so no lane-sparse stores and no scratch slab are needed.
        pieces = []
        for t, (dh, dw) in enumerate(taps):
            off = dh * W + dw
            sh = xf if off == 0 else pltpu.roll(xf, shift=(-off) % P, axis=1)
            if off != 0:
                sh = sh * mask_ref[t:t + 1, :]
            pieces.append(sh)
        # Concatenate in f32 (8-row tile-aligned), single cast to bf16 for MXU.
        return jnp.concatenate(pieces, axis=0).astype(jnp.bfloat16)

    # ---- conv1 (3x3, BN folded) fused with the 1x1 shortcut conv (+BN folded)
    xf = x_ref[0]                                       # (Cin, P) f32
    a1 = im2col_rows(xf)                                # (9*Cin, P) bf16
    m1 = jnp.dot(w1_ref[...], a1, preferred_element_type=jnp.float32)
    m1 = m1 + b1_ref[...]                               # (2*Cout, P)
    h1 = jnp.maximum(m1[:Cout, :], 0.0)                 # conv1 -> BN1 -> ReLU
    sc = m1[Cout:, :]                                   # shortcut conv -> BNsc

    # ---- conv2 (3x3, BN folded)
    a2 = im2col_rows(h1)                                # (9*Cout, P) bf16
    res = jnp.dot(w2_ref[...], a2, preferred_element_type=jnp.float32)
    res = res + b2_ref[...]                             # (Cout, P)

    # ---- SE block on VPU/XLU: avgpool -> 1x1 -> ReLU -> 1x1 -> sigmoid
    s = jnp.mean(res, axis=1, keepdims=True)                           # (Cout, 1)
    z = jnp.sum(wse1_ref[...] * s, axis=0, keepdims=True) + bse1_ref[...]
    z = jnp.maximum(z, 0.0)                                            # (1, Cred)
    g = jax.nn.sigmoid(
        jnp.sum(wse2_ref[...] * z, axis=1, keepdims=True) + bse2_ref[...])  # (Cout, 1)

    # ---- channel gate, residual add, final ReLU (lane-dense store, 256 lanes)
    out_ref[...] = jnp.maximum(res * g + sc, 0.0)[None]


def _full_spec(a):
    nd = a.ndim
    return pl.BlockSpec(a.shape, lambda n, _nd=nd: (0,) * _nd)


def make_tap_masks(H, W):
    """(9, H*W) f32 of {0,1}: 1 where the shifted position stays inside the image."""
    P = H * W
    hh = jnp.arange(P, dtype=jnp.int32) // W
    ww = jnp.arange(P, dtype=jnp.int32) % W
    rows = []
    for kh in range(3):
        for kw in range(3):
            dh, dw = kh - 1, kw - 1
            valid = ((hh + dh >= 0) & (hh + dh < H) &
                     (ww + dw >= 0) & (ww + dw < W))
            rows.append(valid.astype(jnp.float32))
    return jnp.stack(rows, axis=0)


def prepare_params(params):
    """Fold BN (eval) + conv bias into channel-major stacked weights, and fuse
    the 1x1 shortcut conv into extra output rows of conv1 (center-tap cols)."""
    w1 = params["w1"]                                   # (3,3,Cin,Cout) HWIO
    Cin, Cout = w1.shape[2], w1.shape[3]
    cred = params["wse1"].shape[1]

    # conv1 + BN1 folded; rows = Cout, columns ordered (kh, kw, cin)
    w1f = w1 * params["bn1s"][0]
    w1s = jnp.transpose(w1f, (3, 0, 1, 2)).reshape(Cout, 9 * Cin)
    b1 = (params["b1"] * params["bn1s"] + params["bn1b"]).reshape(Cout, 1)

    # shortcut 1x1 (no bias) + BN folded, placed in the center-tap columns (t=4)
    wsc = (params["wsc"] * params["bnscs"][0]).T        # (Cout, Cin)
    wsc_full = jnp.zeros((Cout, 9 * Cin), jnp.float32)
    wsc_full = wsc_full.at[:, 4 * Cin:5 * Cin].set(wsc)
    bsc = params["bnscb"].reshape(Cout, 1)

    w1cat = jnp.concatenate([w1s, wsc_full], axis=0).astype(jnp.bfloat16)
    b1cat = jnp.concatenate([b1, bsc], axis=0).astype(jnp.float32)

    # conv2 + BN2 folded
    w2f = params["w2"] * params["bn2s"][0]
    w2s = jnp.transpose(w2f, (3, 0, 1, 2)).reshape(Cout, 9 * Cout).astype(jnp.bfloat16)
    b2 = (params["b2"] * params["bn2s"] + params["bn2b"]).reshape(Cout, 1).astype(jnp.float32)

    # SE weights kept f32 (VPU path)
    wse1 = params["wse1"].astype(jnp.float32)           # (Cout, Cred)
    bse1 = params["bse1"].reshape(1, cred).astype(jnp.float32)
    wse2t = params["wse2"].T.astype(jnp.float32)        # (Cout, Cred)
    bse2 = params["bse2"].reshape(Cout, 1).astype(jnp.float32)
    return [w1cat, b1cat, w2s, b2, wse1, bse1, wse2t, bse2]


def residual_block_pallas(x_nchw, params):
    """x_nchw: (N, Cin, H, W) float32 (PyTorch layout). Returns (N, Cout, H, W)."""
    N, Cin, H, W = x_nchw.shape
    Cout = params["w1"].shape[-1]
    P = H * W

    kparams = prepare_params(params)
    masks = make_tap_masks(H, W)
    x_flat = x_nchw.reshape(N, Cin, P)                  # free bitcast reshape

    kernel = functools.partial(residual_block_kernel,
                               H=H, W=W, Cin=Cin, Cout=Cout)

    in_specs = [pl.BlockSpec((1, Cin, P), lambda n: (n, 0, 0)),
                _full_spec(masks)]
    in_specs += [_full_spec(a) for a in kparams]

    out = pl.pallas_call(
        kernel,
        out_shape=jax.ShapeDtypeStruct((N, Cout, P), jnp.float32),
        grid_spec=pltpu.PrefetchScalarGridSpec(
            num_scalar_prefetch=0,
            grid=(N,),
            in_specs=in_specs,
            out_specs=pl.BlockSpec((1, Cout, P), lambda n: (n, 0, 0)),
            scratch_shapes=[],
        ),
        compiler_params=pltpu.CompilerParams(
            dimension_semantics=("parallel",)),
    )(x_flat, masks, *kparams)
    return out.reshape(N, Cout, H, W)


def make_params(key, cin, cout):
    """Deterministic synthetic parameters (PyTorch-module shapes, HWIO convs)."""
    cred = cout // 8
    ks = jax.random.split(key, 16)
    eps = 1e-5

    def bn_fold(kg, kb, km, kv, c):
        gamma = 1.0 + 0.1 * jax.random.normal(kg, (1, c), jnp.float32)
        beta = 0.1 * jax.random.normal(kb, (1, c), jnp.float32)
        mean = 0.1 * jax.random.normal(km, (1, c), jnp.float32)
        var = 1.0 + 0.1 * jax.random.uniform(kv, (1, c), jnp.float32)
        scale = gamma / jnp.sqrt(var + eps)
        bias = beta - mean * scale
        return scale, bias

    bn1s, bn1b = bn_fold(ks[4], ks[5], ks[6], ks[7], cout)
    bn2s, bn2b = bn_fold(ks[8], ks[9], ks[10], ks[11], cout)
    bnscs, bnscb = bn_fold(ks[12], ks[13], ks[14], ks[15], cout)

    return {
        "w1": 0.1 * jax.random.normal(ks[0], (3, 3, cin, cout), jnp.float32),
        "b1": 0.05 * jax.random.normal(ks[1], (1, cout), jnp.float32),
        "bn1s": bn1s, "bn1b": bn1b,
        "w2": 0.1 * jax.random.normal(ks[2], (3, 3, cout, cout), jnp.float32),
        "b2": 0.05 * jax.random.normal(ks[3], (1, cout), jnp.float32),
        "bn2s": bn2s, "bn2b": bn2b,
        "wse1": 0.2 * jax.random.normal(jax.random.fold_in(key, 101),
                                        (cout, cred), jnp.float32),
        "bse1": 0.05 * jax.random.normal(jax.random.fold_in(key, 102),
                                         (1, cred), jnp.float32),
        "wse2": 0.2 * jax.random.normal(jax.random.fold_in(key, 103),
                                        (cred, cout), jnp.float32),
        "bse2": 0.05 * jax.random.normal(jax.random.fold_in(key, 104),
                                         (1, cout), jnp.float32),
        "wsc": 0.2 * jax.random.normal(jax.random.fold_in(key, 105),
                                       (cin, cout), jnp.float32),
        "bnscs": bnscs, "bnscb": bnscb,
    }


def residual_block_ref(x_nhwc, p):
    """Pure-JAX f32 reference (NHWC) mirroring the PyTorch forward (BN eval)."""
    def conv3x3(x, w):
        return lax.conv_general_dilated(
            x, w, (1, 1), "SAME",
            dimension_numbers=("NHWC", "HWIO", "NHWC"))

    h = conv3x3(x_nhwc, p["w1"]) + p["b1"][0]
    h = h * p["bn1s"][0] + p["bn1b"][0]
    h = jnp.maximum(h, 0.0)
    h = conv3x3(h, p["w2"]) + p["b2"][0]
    h = h * p["bn2s"][0] + p["bn2b"][0]

    s = jnp.mean(h, axis=(1, 2), keepdims=True)
    z = jnp.maximum(jnp.einsum("nhwc,cd->nhwd", s, p["wse1"]) + p["bse1"][0], 0.0)
    g = jax.nn.sigmoid(jnp.einsum("nhwc,cd->nhwd", z, p["wse2"]) + p["bse2"][0])
    out = h * g

    sc = jnp.einsum("nhwc,cd->nhwd", x_nhwc, p["wsc"])
    sc = sc * p["bnscs"][0] + p["bnscb"][0]
    return jnp.maximum(out + sc, 0.0)


if __name__ == "__main__":
    key = jax.random.PRNGKey(0)
    N, Cin, H, W = 2, 8, 16, 16
    Cout = 16                                    # != Cin -> shortcut conv path

    kx, kp = jax.random.split(key)
    x_nchw = jax.random.normal(kx, (N, Cin, H, W), jnp.float32)   # PyTorch layout
    params = make_params(kp, Cin, Cout)

    out = residual_block_pallas(x_nchw, params)  # (N, Cout, H, W) NCHW
    out = jax.block_until_ready(out)

    x_nhwc = jnp.transpose(x_nchw, (0, 2, 3, 1))
    ref = jnp.transpose(residual_block_ref(x_nhwc, params), (0, 3, 1, 2))

    assert out.shape == (N, Cout, H, W)
    # bf16 MXU inputs (f32 accumulate) -> relaxed tolerance vs f32 reference.
    assert jnp.allclose(out, ref, rtol=5e-2, atol=5e-2), (
        float(jnp.max(jnp.abs(out - ref))))

    print("KERNEL_OK")
</pallas_src>

<mosaic_0001>
module attributes {stable_mosaic.version = 11 : i64} {
  func.func @residual_block_kernel(%arg0: i32, %arg1: memref<1x8x256xf32, #tpu.memory_space<vmem>>, %arg2: memref<9x256xf32, #tpu.memory_space<vmem>>, %arg3: memref<32x72xbf16, #tpu.memory_space<vmem>>, %arg4: memref<32x1xf32, #tpu.memory_space<vmem>>, %arg5: memref<16x144xbf16, #tpu.memory_space<vmem>>, %arg6: memref<16x1xf32, #tpu.memory_space<vmem>>, %arg7: memref<16x2xf32, #tpu.memory_space<vmem>>, %arg8: memref<1x2xf32, #tpu.memory_space<vmem>>, %arg9: memref<16x2xf32, #tpu.memory_space<vmem>>, %arg10: memref<16x1xf32, #tpu.memory_space<vmem>>, %arg11: memref<1x16x256xf32, #tpu.memory_space<vmem>>) attributes {dimension_semantics = [#tpu.dimension_semantics<parallel>], iteration_bounds = array<i64: 2>, scalar_prefetch = 0 : i64, scratch_operands = 0 : i64, tpu.core_type = #tpu.core_type<tc>, window_params = [{transform_indices = @transform_0, window_bounds = array<i64: 1, 8, 256>}, {pipeline_mode = #tpu.pipeline_mode<synchronous>, transform_indices = @transform_1, window_bounds = array<i64: 9, 256>}, {pipeline_mode = #tpu.pipeline_mode<synchronous>, transform_indices = @transform_2, window_bounds = array<i64: 32, 72>}, {pipeline_mode = #tpu.pipeline_mode<synchronous>, transform_indices = @transform_3, window_bounds = array<i64: 32, 1>}, {pipeline_mode = #tpu.pipeline_mode<synchronous>, transform_indices = @transform_4, window_bounds = array<i64: 16, 144>}, {pipeline_mode = #tpu.pipeline_mode<synchronous>, transform_indices = @transform_5, window_bounds = array<i64: 16, 1>}, {pipeline_mode = #tpu.pipeline_mode<synchronous>, transform_indices = @transform_6, window_bounds = array<i64: 16, 2>}, {pipeline_mode = #tpu.pipeline_mode<synchronous>, transform_indices = @transform_7, window_bounds = array<i64: 1, 2>}, {pipeline_mode = #tpu.pipeline_mode<synchronous>, transform_indices = @transform_8, window_bounds = array<i64: 16, 2>}, {pipeline_mode = #tpu.pipeline_mode<synchronous>, transform_indices = @transform_9, window_bounds = array<i64: 16, 1>}, {transform_indices = @transform_10, window_bounds = array<i64: 1, 16, 256>}]} {
    %c0 = arith.constant 0 : index
    %c0_0 = arith.constant 0 : index
    %c0_1 = arith.constant 0 : index
    %0 = vector.load %arg1[%c0, %c0_0, %c0_1] : memref<1x8x256xf32, #tpu.memory_space<vmem>>, vector<1x8x256xf32>
    %1 = vector.shape_cast %0 : vector<1x8x256xf32> to vector<8x256xf32>
    %c17_i32 = arith.constant 17 : i32
    %2 = tpu.dynamic_rotate %1 by %c17_i32 dim 1 : vector<8x256xf32>, i32 -> vector<8x256xf32>
    %c0_2 = arith.constant 0 : index
    %c0_3 = arith.constant 0 : index
    %3 = vector.load %arg2[%c0_2, %c0_3] : memref<9x256xf32, #tpu.memory_space<vmem>>, vector<1x256xf32>
    %4 = vector.broadcast %3 : vector<1x256xf32> to vector<8x256xf32>
    %5 = arith.mulf %2, %4 : vector<8x256xf32>
    %c16_i32 = arith.constant 16 : i32
    %6 = tpu.dynamic_rotate %1 by %c16_i32 dim 1 : vector<8x256xf32>, i32 -> vector<8x256xf32>
    %c1 = arith.constant 1 : index
    %c0_4 = arith.constant 0 : index
    %7 = vector.load %arg2[%c1, %c0_4] : memref<9x256xf32, #tpu.memory_space<vmem>>, vector<1x256xf32>
    %8 = vector.broadcast %7 : vector<1x256xf32> to vector<8x256xf32>
    %9 = arith.mulf %6, %8 : vector<8x256xf32>
    %c15_i32 = arith.constant 15 : i32
    %10 = tpu.dynamic_rotate %1 by %c15_i32 dim 1 : vector<8x256xf32>, i32 -> vector<8x256xf32>
    %c2 = arith.constant 2 : index
    %c0_5 = arith.constant 0 : index
    %11 = vector.load %arg2[%c2, %c0_5] : memref<9x256xf32, #tpu.memory_space<vmem>>, vector<1x256xf32>
    %12 = vector.broadcast %11 : vector<1x256xf32> to vector<8x256xf32>
    %13 = arith.mulf %10, %12 : vector<8x256xf32>
    %c1_i32 = arith.constant 1 : i32
    %14 = tpu.dynamic_rotate %1 by %c1_i32 dim 1 : vector<8x256xf32>, i32 -> vector<8x256xf32>
    %c3 = arith.constant 3 : index
    %c0_6 = arith.constant 0 : index
    %15 = vector.load %arg2[%c3, %c0_6] : memref<9x256xf32, #tpu.memory_space<vmem>>, vector<1x256xf32>
    %16 = vector.broadcast %15 : vector<1x256xf32> to vector<8x256xf32>
    %17 = arith.mulf %14, %16 : vector<8x256xf32>
    %c255_i32 = arith.constant 255 : i32
    %18 = tpu.dynamic_rotate %1 by %c255_i32 dim 1 : vector<8x256xf32>, i32 -> vector<8x256xf32>
    %c5 = arith.constant 5 : index
    %c0_7 = arith.constant 0 : index
    %19 = vector.load %arg2[%c5, %c0_7] : memref<9x256xf32, #tpu.memory_space<vmem>>, vector<1x256xf32>
    %20 = vector.broadcast %19 : vector<1x256xf32> to vector<8x256xf32>
    %21 = arith.mulf %18, %20 : vector<8x256xf32>
    %c241_i32 = arith.constant 241 : i32
    %22 = tpu.dynamic_rotate %1 by %c241_i32 dim 1 : vector<8x256xf32>, i32 -> vector<8x256xf32>
    %c6 = arith.constant 6 : index
    %c0_8 = arith.constant 0 : index
    %23 = vector.load %arg2[%c6, %c0_8] : memref<9x256xf32, #tpu.memory_space<vmem>>, vector<1x256xf32>
    %24 = vector.broadcast %23 : vector<1x256xf32> to vector<8x256xf32>
    %25 = arith.mulf %22, %24 : vector<8x256xf32>
    %c240_i32 = arith.constant 240 : i32
    %26 = tpu.dynamic_rotate %1 by %c240_i32 dim 1 : vector<8x256xf32>, i32 -> vector<8x256xf32>
    %c7 = arith.constant 7 : index
    %c0_9 = arith.constant 0 : index
    %27 = vector.load %arg2[%c7, %c0_9] : memref<9x256xf32, #tpu.memory_space<vmem>>, vector<1x256xf32>
    %28 = vector.broadcast %27 : vector<1x256xf32> to vector<8x256xf32>
    %29 = arith.mulf %26, %28 : vector<8x256xf32>
    %c239_i32 = arith.constant 239 : i32
    %30 = tpu.dynamic_rotate %1 by %c239_i32 dim 1 : vector<8x256xf32>, i32 -> vector<8x256xf32>
    %c8 = arith.constant 8 : index
    %c0_10 = arith.constant 0 : index
    %31 = vector.load %arg2[%c8, %c0_10] : memref<9x256xf32, #tpu.memory_space<vmem>>, vector<1x256xf32>
    %32 = vector.broadcast %31 : vector<1x256xf32> to vector<8x256xf32>
    %33 = arith.mulf %30, %32 : vector<8x256xf32>
    %34 = tpu.concatenate %5, %9, %13, %17, %1, %21, %25, %29, %33 in 0 : vector<8x256xf32>, vector<8x256xf32>, vector<8x256xf32>, vector<8x256xf32>, vector<8x256xf32>, vector<8x256xf32>, vector<8x256xf32>, vector<8x256xf32>, vector<8x256xf32> -> vector<72x256xf32>
    %35 = arith.truncf %34 : vector<72x256xf32> to vector<72x256xbf16>
    %c0_11 = arith.constant 0 : index
    %c0_12 = arith.constant 0 : index
    %36 = vector.load %arg3[%c0_11, %c0_12] : memref<32x72xbf16, #tpu.memory_space<vmem>>, vector<32x72xbf16>
    %cst = arith.constant dense<0.000000e+00> : vector<32x256xf32>
    %37 = tpu.matmul %36, %35, %cst {dimension_numbers = #tpu.dot_dimension_numbers<[1], [0], [0], [1], [0, 0, 1, 1], [], []>} : vector<32x72xbf16>, vector<72x256xbf16>, vector<32x256xf32> -> vector<32x256xf32>
    %c0_13 = arith.constant 0 : index
    %c0_14 = arith.constant 0 : index
    %38 = vector.load %arg4[%c0_13, %c0_14] : memref<32x1xf32, #tpu.memory_space<vmem>>, vector<32x1xf32>
    %39 = vector.broadcast %38 : vector<32x1xf32> to vector<32x256xf32>
    %40 = arith.addf %37, %39 : vector<32x256xf32>
    %41 = vector.extract_strided_slice %40 {offsets = [0, 0], sizes = [16, 256], strides = [1, 1]} : vector<32x256xf32> to vector<16x256xf32>
    %cst_15 = arith.constant 0.000000e+00 : f32
    %42 = vector.broadcast %cst_15 : f32 to vector<16x256xf32>
    %43 = arith.maximumf %41, %42 : vector<16x256xf32>
    %44 = vector.extract_strided_slice %40 {offsets = [16, 0], sizes = [16, 256], strides = [1, 1]} : vector<32x256xf32> to vector<16x256xf32>
    %c17_i32_16 = arith.constant 17 : i32
    %45 = tpu.dynamic_rotate %43 by %c17_i32_16 dim 1 : vector<16x256xf32>, i32 -> vector<16x256xf32>
    %c0_17 = arith.constant 0 : index
    %c0_18 = arith.constant 0 : index
    %46 = vector.load %arg2[%c0_17, %c0_18] : memref<9x256xf32, #tpu.memory_space<vmem>>, vector<1x256xf32>
    %47 = vector.broadcast %46 : vector<1x256xf32> to vector<16x256xf32>
    %48 = arith.mulf %45, %47 : vector<16x256xf32>
    %c16_i32_19 = arith.constant 16 : i32
    %49 = tpu.dynamic_rotate %43 by %c16_i32_19 dim 1 : vector<16x256xf32>, i32 -> vector<16x256xf32>
    %c1_20 = arith.constant 1 : index
    %c0_21 = arith.constant 0 : index
    %50 = vector.load %arg2[%c1_20, %c0_21] : memref<9x256xf32, #tpu.memory_space<vmem>>, vector<1x256xf32>
    %51 = vector.broadcast %50 : vector<1x256xf32> to vector<16x256xf32>
    %52 = arith.mulf %49, %51 : vector<16x256xf32>
    %c15_i32_22 = arith.constant 15 : i32
    %53 = tpu.dynamic_rotate %43 by %c15_i32_22 dim 1 : vector<16x256xf32>, i32 -> vector<16x256xf32>
    %c2_23 = arith.constant 2 : index
    %c0_24 = arith.constant 0 : index
    %54 = vector.load %arg2[%c2_23, %c0_24] : memref<9x256xf32, #tpu.memory_space<vmem>>, vector<1x256xf32>
    %55 = vector.broadcast %54 : vector<1x256xf32> to vector<16x256xf32>
    %56 = arith.mulf %53, %55 : vector<16x256xf32>
    %c1_i32_25 = arith.constant 1 : i32
    %57 = tpu.dynamic_rotate %43 by %c1_i32_25 dim 1 : vector<16x256xf32>, i32 -> vector<16x256xf32>
    %c3_26 = arith.constant 3 : index
    %c0_27 = arith.constant 0 : index
    %58 = vector.load %arg2[%c3_26, %c0_27] : memref<9x256xf32, #tpu.memory_space<vmem>>, vector<1x256xf32>
    %59 = vector.broadcast %58 : vector<1x256xf32> to vector<16x256xf32>
    %60 = arith.mulf %57, %59 : vector<16x256xf32>
    %c255_i32_28 = arith.constant 255 : i32
    %61 = tpu.dynamic_rotate %43 by %c255_i32_28 dim 1 : vector<16x256xf32>, i32 -> vector<16x256xf32>
    %c5_29 = arith.constant 5 : index
    %c0_30 = arith.constant 0 : index
    %62 = vector.load %arg2[%c5_29, %c0_30] : memref<9x256xf32, #tpu.memory_space<vmem>>, vector<1x256xf32>
    %63 = vector.broadcast %62 : vector<1x256xf32> to vector<16x256xf32>
    %64 = arith.mulf %61, %63 : vector<16x256xf32>
    %c241_i32_31 = arith.constant 241 : i32
    %65 = tpu.dynamic_rotate %43 by %c241_i32_31 dim 1 : vector<16x256xf32>, i32 -> vector<16x256xf32>
    %c6_32 = arith.constant 6 : index
    %c0_33 = arith.constant 0 : index
    %66 = vector.load %arg2[%c6_32, %c0_33] : memref<9x256xf32, #tpu.memory_space<vmem>>, vector<1x256xf32>
    %67 = vector.broadcast %66 : vector<1x256xf32> to vector<16x256xf32>
    %68 = arith.mulf %65, %67 : vector<16x256xf32>
    %c240_i32_34 = arith.constant 240 : i32
    %69 = tpu.dynamic_rotate %43 by %c240_i32_34 dim 1 : vector<16x256xf32>, i32 -> vector<16x256xf32>
    %c7_35 = arith.constant 7 : index
    %c0_36 = arith.constant 0 : index
    %70 = vector.load %arg2[%c7_35, %c0_36] : memref<9x256xf32, #tpu.memory_space<vmem>>, vector<1x256xf32>
    %71 = vector.broadcast %70 : vector<1x256xf32> to vector<16x256xf32>
    %72 = arith.mulf %69, %71 : vector<16x256xf32>
    %c239_i32_37 = arith.constant 239 : i32
    %73 = tpu.dynamic_rotate %43 by %c239_i32_37 dim 1 : vector<16x256xf32>, i32 -> vector<16x256xf32>
    %c8_38 = arith.constant 8 : index
    %c0_39 = arith.constant 0 : index
    %74 = vector.load %arg2[%c8_38, %c0_39] : memref<9x256xf32, #tpu.memory_space<vmem>>, vector<1x256xf32>
    %75 = vector.broadcast %74 : vector<1x256xf32> to vector<16x256xf32>
    %76 = arith.mulf %73, %75 : vector<16x256xf32>
    %77 = tpu.concatenate %48, %52, %56, %60, %43, %64, %68, %72, %76 in 0 : vector<16x256xf32>, vector<16x256xf32>, vector<16x256xf32>, vector<16x256xf32>, vector<16x256xf32>, vector<16x256xf32>, vector<16x256xf32>, vector<16x256xf32>, vector<16x256xf32> -> vector<144x256xf32>
    %78 = arith.truncf %77 : vector<144x256xf32> to vector<144x256xbf16>
    %c0_40 = arith.constant 0 : index
    %c0_41 = arith.constant 0 : index
    %79 = vector.load %arg5[%c0_40, %c0_41] : memref<16x144xbf16, #tpu.memory_space<vmem>>, vector<16x144xbf16>
    %cst_42 = arith.constant dense<0.000000e+00> : vector<16x256xf32>
    %80 = tpu.matmul %79, %78, %cst_42 {dimension_numbers = #tpu.dot_dimension_numbers<[1], [0], [0], [1], [0, 0, 1, 1], [], []>} : vector<16x144xbf16>, vector<144x256xbf16>, vector<16x256xf32> -> vector<16x256xf32>
    %c0_43 = arith.constant 0 : index
    %c0_44 = arith.constant 0 : index
    %81 = vector.load %arg6[%c0_43, %c0_44] : memref<16x1xf32, #tpu.memory_space<vmem>>, vector<16x1xf32>
    %82 = vector.broadcast %81 : vector<16x1xf32> to vector<16x256xf32>
    %83 = arith.addf %80, %82 : vector<16x256xf32>
    %cst_45 = arith.constant dense<0.000000e+00> : vector<16xf32>
    %84 = vector.multi_reduction <add>, %83, %cst_45 [1] : vector<16x256xf32> to vector<16xf32>
    %85 = vector.shape_cast %84 : vector<16xf32> to vector<16x1xf32>
    %cst_46 = arith.constant 2.560000e+02 : f32
    %86 = vector.broadcast %cst_46 : f32 to vector<16x1xf32>
    %87 = arith.divf %85, %86 : vector<16x1xf32>
    %c0_47 = arith.constant 0 : index
    %c0_48 = arith.constant 0 : index
    %88 = vector.load %arg7[%c0_47, %c0_48] : memref<16x2xf32, #tpu.memory_space<vmem>>, vector<16x2xf32>
    %89 = vector.broadcast %87 : vector<16x1xf32> to vector<16x2xf32>
    %90 = arith.mulf %88, %89 : vector<16x2xf32>
    %cst_49 = arith.constant dense<0.000000e+00> : vector<2xf32>
    %91 = vector.multi_reduction <add>, %90, %cst_49 [0] : vector<16x2xf32> to vector<2xf32>
    %92 = vector.shape_cast %91 : vector<2xf32> to vector<1x2xf32>
    %c0_50 = arith.constant 0 : index
    %c0_51 = arith.constant 0 : index
    %93 = vector.load %arg8[%c0_50, %c0_51] : memref<1x2xf32, #tpu.memory_space<vmem>>, vector<1x2xf32>
    %94 = arith.addf %92, %93 : vector<1x2xf32>
    %cst_52 = arith.constant 0.000000e+00 : f32
    %95 = vector.broadcast %cst_52 : f32 to vector<1x2xf32>
    %96 = arith.maximumf %94, %95 : vector<1x2xf32>
    %c0_53 = arith.constant 0 : index
    %c0_54 = arith.constant 0 : index
    %97 = vector.load %arg9[%c0_53, %c0_54] : memref<16x2xf32, #tpu.memory_space<vmem>>, vector<16x2xf32>
    %98 = vector.broadcast %96 : vector<1x2xf32> to vector<16x2xf32>
    %99 = arith.mulf %97, %98 : vector<16x2xf32>
    %cst_55 = arith.constant dense<0.000000e+00> : vector<16xf32>
    %100 = vector.multi_reduction <add>, %99, %cst_55 [1] : vector<16x2xf32> to vector<16xf32>
    %101 = vector.shape_cast %100 : vector<16xf32> to vector<16x1xf32>
    %c0_56 = arith.constant 0 : index
    %c0_57 = arith.constant 0 : index
    %102 = vector.load %arg10[%c0_56, %c0_57] : memref<16x1xf32, #tpu.memory_space<vmem>>, vector<16x1xf32>
    %103 = arith.addf %101, %102 : vector<16x1xf32>
    %104 = arith.negf %103 : vector<16x1xf32>
    %105 = math.exp %104 : vector<16x1xf32>
    %cst_58 = arith.constant 1.000000e+00 : f32
    %106 = vector.broadcast %cst_58 : f32 to vector<16x1xf32>
    %107 = arith.addf %106, %105 : vector<16x1xf32>
    %108 = arith.divf %106, %107 : vector<16x1xf32>
    %109 = vector.broadcast %108 : vector<16x1xf32> to vector<16x256xf32>
    %110 = arith.mulf %83, %109 : vector<16x256xf32>
    %111 = arith.addf %110, %44 : vector<16x256xf32>
    %cst_59 = arith.constant 0.000000e+00 : f32
    %112 = vector.broadcast %cst_59 : f32 to vector<16x256xf32>
    %113 = arith.maximumf %111, %112 : vector<16x256xf32>
    %114 = vector.shape_cast %113 : vector<16x256xf32> to vector<1x16x256xf32>
    %c0_60 = arith.constant 0 : index
    %c0_61 = arith.constant 0 : index
    %c0_62 = arith.constant 0 : index
    %115 = vector.load %arg11[%c0_60, %c0_61, %c0_62] : memref<1x16x256xf32, #tpu.memory_space<vmem>>, vector<1x16x256xf32>
    tpu.vector_store %arg11[%c0_60, %c0_61, %c0_62], %114 {strides = array<i32>} : memref<1x16x256xf32, #tpu.memory_space<vmem>>, vector<1x16x256xf32>,
    return
  }
  func.func @transform_0(%arg0: i32) -> (i32, i32, i32) {
    %c0_i32 = arith.constant 0 : i32
    %c0_i32_0 = arith.constant 0 : i32
    %c0_i32_1 = arith.constant 0 : i32
    return %arg0, %c0_i32, %c0_i32_0 : i32, i32, i32
  }
  func.func @transform_1(%arg0: i32) -> (i32, i32) {
    %c0_i32 = arith.constant 0 : i32
    %c0_i32_0 = arith.constant 0 : i32
    %c0_i32_1 = arith.constant 0 : i32
    return %c0_i32, %c0_i32_0 : i32, i32
  }
  func.func @transform_2(%arg0: i32) -> (i32, i32) {
    %c0_i32 = arith.constant 0 : i32
    %c0_i32_0 = arith.constant 0 : i32
    %c0_i32_1 = arith.constant 0 : i32
    return %c0_i32, %c0_i32_0 : i32, i32
  }
  func.func @transform_3(%arg0: i32) -> (i32, i32) {
    %c0_i32 = arith.constant 0 : i32
    %c0_i32_0 = arith.constant 0 : i32
    %c0_i32_1 = arith.constant 0 : i32
    return %c0_i32, %c0_i32_0 : i32, i32
  }
  func.func @transform_4(%arg0: i32) -> (i32, i32) {
    %c0_i32 = arith.constant 0 : i32
    %c0_i32_0 = arith.constant 0 : i32
    %c0_i32_1 = arith.constant 0 : i32
    return %c0_i32, %c0_i32_0 : i32, i32
  }
  func.func @transform_5(%arg0: i32) -> (i32, i32) {
    %c0_i32 = arith.constant 0 : i32
    %c0_i32_0 = arith.constant 0 : i32
    %c0_i32_1 = arith.constant 0 : i32
    return %c0_i32, %c0_i32_0 : i32, i32
  }
  func.func @transform_6(%arg0: i32) -> (i32, i32) {
    %c0_i32 = arith.constant 0 : i32
    %c0_i32_0 = arith.constant 0 : i32
    %c0_i32_1 = arith.constant 0 : i32
    return %c0_i32, %c0_i32_0 : i32, i32
  }
  func.func @transform_7(%arg0: i32) -> (i32, i32) {
    %c0_i32 = arith.constant 0 : i32
    %c0_i32_0 = arith.constant 0 : i32
    %c0_i32_1 = arith.constant 0 : i32
    return %c0_i32, %c0_i32_0 : i32, i32
  }
  func.func @transform_8(%arg0: i32) -> (i32, i32) {
    %c0_i32 = arith.constant 0 : i32
    %c0_i32_0 = arith.constant 0 : i32
    %c0_i32_1 = arith.constant 0 : i32
    return %c0_i32, %c0_i32_0 : i32, i32
  }
  func.func @transform_9(%arg0: i32) -> (i32, i32) {
    %c0_i32 = arith.constant 0 : i32
    %c0_i32_0 = arith.constant 0 : i32
    %c0_i32_1 = arith.constant 0 : i32
    return %c0_i32, %c0_i32_0 : i32, i32
  }
  func.func @transform_10(%arg0: i32) -> (i32, i32, i32) {
    %c0_i32 = arith.constant 0 : i32
    %c0_i32_0 = arith.constant 0 : i32
    %c0_i32_1 = arith.constant 0 : i32
    return %arg0, %c0_i32, %c0_i32_0 : i32, i32, i32
  }
}

</mosaic_0001>

<llo_original>
// kernel: tpu_custom_call.1
$region0: #{tpu_custom_call.1}
  #allocation0 [shape = 'u32[]', space=smem, size = 0x4, offset = 0x4, fixed_abs, tag = 'smem constant byte address 0x4 - core index']
  #allocation1 [shape = 'u32[144,128]{1,0:T(1,128)}', space=vmem, size = 0x12000, scoped, tag = 'internal scratch']
  %s0 = inlined_call_operand.vmem [shape: f32[2,8,256], index: 0, kind: input, shape index: {}]
  %s1 = inlined_call_operand.vmem [shape: f32[9,256], index: 1, kind: input, shape index: {}]
  %s2 = inlined_call_operand.vmem [shape: bf16[32,72], index: 2, kind: input, shape index: {}]
  %s3 = inlined_call_operand.vmem [shape: f32[32,1], index: 3, kind: input, shape index: {}]
  %s4 = inlined_call_operand.vmem [shape: bf16[16,144], index: 4, kind: input, shape index: {}]
  %s5 = inlined_call_operand.vmem [shape: f32[16,1], index: 5, kind: input, shape index: {}]
  %s6 = inlined_call_operand.vmem [shape: f32[16,2], index: 6, kind: input, shape index: {}]
  %s7 = inlined_call_operand.vmem [shape: f32[1,2], index: 7, kind: input, shape index: {}]
  %s8 = inlined_call_operand.vmem [shape: f32[16,2], index: 8, kind: input, shape index: {}]
  %s9 = inlined_call_operand.vmem [shape: f32[16,1], index: 9, kind: input, shape index: {}]
  %s10 = inlined_call_operand.hbm [shape: f32[2,16,256], index: 10, kind: output, shape index: {}]
  %s11 = sld [smem:[#allocation0]]
  $region73: #{tpu_custom_call.1} parent=0
    _
  %s13 = ssub.s32 1, %s11
  %s14 = scalar_select 0, %s13, %s11
  $region1: #{tpu_custom_call.1} parent=0
    #allocation2 [shape = 'u8[32768]{0}', space=vmem, size = 0x8000, scoped, tag = 'output window, operand 0']
    #allocation3 [shape = 's32[2]{0}', space=sflag, size = 0x8, scoped, tag = 'scoped memory for tpu_custom_call.1']
    %15 = vsyncpa [#allocation3], 0
    %s16 = scalar_lea.sflag [#allocation3], 1
    %17 = vsyncpa %s16, 0
    loop: start=0, step=1, limit=4
    $region2: #{tpu_custom_call.1} parent=1 // loop_pre_header
      _
    $region3: #{tpu_custom_call.1} parent=1 // loop_header
      %s19 = sphi 0, %s23
      %p20 = scmp.ge.s32.totalorder %s19, 4
      %s29 = sphi 0, %s31
      %s32 = sphi 0, %s29
      %s33 = sphi 0, %s32
      %s49 = sphi 0, %s33
      %s53 = sphi 0, %s53
      %s55 = sphi 0, %s53
      %s56 = sphi 0, %s55
      %s70 = sphi 0, %s56
      %s74 = sphi 0, %s74
      %s76 = sphi 0, %s74
      %s77 = sphi 0, %s76
      %s91 = sphi 0, %s77
      %s95 = sphi 0, %s95
      %s97 = sphi 0, %s95
      %s98 = sphi 0, %s97
      %s112 = sphi 0, %s98
      %s116 = sphi 0, %s116
      %s118 = sphi 0, %s116
      %s119 = sphi 0, %s118
      %s133 = sphi 0, %s119
      %s137 = sphi 0, %s137
      %s139 = sphi 0, %s137
      %s140 = sphi 0, %s139
      %s154 = sphi 0, %s140
      %s158 = sphi 0, %s158
      %s160 = sphi 0, %s158
      %s161 = sphi 0, %s160
      %s175 = sphi 0, %s161
      %s179 = sphi 0, %s179
      %s181 = sphi 0, %s179
      %s182 = sphi 0, %s181
      %s196 = sphi 0, %s182
      %s200 = sphi 0, %s200
      %s202 = sphi 0, %s200
      %s203 = sphi 0, %s202
      %s217 = sphi 0, %s203
      %s221 = sphi 0, %s221
      %s223 = sphi 0, %s221
      %s224 = sphi 0, %s223
      %s238 = sphi 0, %s224
      %s244 = sphi 0, %s246
      %s247 = sphi 0, %s244
      %s248 = sphi 0, %s247
      %s264 = sphi 0, %s248
    $region4: #{tpu_custom_call.1} parent=1 // loop_header_branch
      %22 = sbr.rel (%p20) target = $region8
    $region5: #{tpu_custom_call.1} parent=1 // loop_body
      %s24 = ssub.s32 %s19, 1
      %s25 = ssub.s32 %s19, 2
      %s26 = sadd.s32 %s19, 1
      %s27 = ssub.s32 %s19, %s26
      %p28 = scmp.eq.s32.totalorder %s27, 0
      %s30 = sadd.s32 %s29, 1
      %s31 = scalar_select %p28, %s29, %s30
      %p34 = pneg %p28
      %p35 = scmp.eq.s32.totalorder %s19, 1
      %p36 = por %p34, %p35
      %p37 = scmp.ne.s32.totalorder %s29, %s32
      %p38 = scmp.eq.s32.totalorder %s19, 0
      %p39 = por %p37, %p38
      %p40 = scmp.ne.s32.totalorder %s29, %s32
      %p41 = scmp.eq.s32.totalorder %s24, 1
      %p42 = por %p40, %p41
      %p43 = scmp.ne.s32.totalorder %s32, %s33
      %p44 = scmp.eq.s32.totalorder %s24, 0
      %p45 = por %p43, %p44
      %p46 = scmp.ne.s32.totalorder %s32, %s33
      %p47 = scmp.eq.s32.totalorder %s25, 1
      %p48 = por %p46, %p47
      %p50 = scmp.ne.s32.totalorder %s33, %s49
      %p51 = scmp.eq.s32.totalorder %s25, 0
      %p52 = por %p50, %p51
      %s54 = sadd.s32 %s53, 1
      %p57 = scmp.eq.s32.totalorder %s19, 1
      %p58 = scmp.ne.s32.totalorder %s53, %s55
      %p59 = scmp.eq.s32.totalorder %s19, 0
      %p60 = por %p58, %p59
      %p61 = scmp.ne.s32.totalorder %s53, %s55
      %p62 = scmp.eq.s32.totalorder %s24, 1
      %p63 = por %p61, %p62
      %p64 = scmp.ne.s32.totalorder %s55, %s56
      %p65 = scmp.eq.s32.totalorder %s24, 0
      %p66 = por %p64, %p65
      %p67 = scmp.ne.s32.totalorder %s55, %s56
      %p68 = scmp.eq.s32.totalorder %s25, 1
      %p69 = por %p67, %p68
      %p71 = scmp.ne.s32.totalorder %s56, %s70
      %p72 = scmp.eq.s32.totalorder %s25, 0
      %p73 = por %p71, %p72
      %s75 = sadd.s32 %s74, 1
      %p78 = scmp.eq.s32.totalorder %s19, 1
      %p79 = scmp.ne.s32.totalorder %s74, %s76
      %p80 = scmp.eq.s32.totalorder %s19, 0
      %p81 = por %p79, %p80
      %p82 = scmp.ne.s32.totalorder %s74, %s76
      %p83 = scmp.eq.s32.totalorder %s24, 1
      %p84 = por %p82, %p83
      %p85 = scmp.ne.s32.totalorder %s76, %s77
      %p86 = scmp.eq.s32.totalorder %s24, 0
      %p87 = por %p85, %p86
      %p88 = scmp.ne.s32.totalorder %s76, %s77
      %p89 = scmp.eq.s32.totalorder %s25, 1
      %p90 = por %p88, %p89
      %p92 = scmp.ne.s32.totalorder %s77, %s91
      %p93 = scmp.eq.s32.totalorder %s25, 0
      %p94 = por %p92, %p93
      %s96 = sadd.s32 %s95, 1
      %p99 = scmp.eq.s32.totalorder %s19, 1
      %p100 = scmp.ne.s32.totalorder %s95, %s97
      %p101 = scmp.eq.s32.totalorder %s19, 0
      %p102 = por %p100, %p101
      %p103 = scmp.ne.s32.totalorder %s95, %s97
      %p104 = scmp.eq.s32.totalorder %s24, 1
      %p105 = por %p103, %p104
      %p106 = scmp.ne.s32.totalorder %s97, %s98
      %p107 = scmp.eq.s32.totalorder %s24, 0
      %p108 = por %p106, %p107
      %p109 = scmp.ne.s32.totalorder %s97, %s98
      %p110 = scmp.eq.s32.totalorder %s25, 1
      %p111 = por %p109, %p110
      %p113 = scmp.ne.s32.totalorder %s98, %s112
      %p114 = scmp.eq.s32.totalorder %s25, 0
      %p115 = por %p113, %p114
      %s117 = sadd.s32 %s116, 1
      %p120 = scmp.eq.s32.totalorder %s19, 1
      %p121 = scmp.ne.s32.totalorder %s116, %s118
      %p122 = scmp.eq.s32.totalorder %s19, 0
      %p123 = por %p121, %p122
      %p124 = scmp.ne.s32.totalorder %s116, %s118
      %p125 = scmp.eq.s32.totalorder %s24, 1
      %p126 = por %p124, %p125
      %p127 = scmp.ne.s32.totalorder %s118, %s119
      %p128 = scmp.eq.s32.totalorder %s24, 0
      %p129 = por %p127, %p128
      %p130 = scmp.ne.s32.totalorder %s118, %s119
      %p131 = scmp.eq.s32.totalorder %s25, 1
      %p132 = por %p130, %p131
      %p134 = scmp.ne.s32.totalorder %s119, %s133
      %p135 = scmp.eq.s32.totalorder %s25, 0
      %p136 = por %p134, %p135
      %s138 = sadd.s32 %s137, 1
      %p141 = scmp.eq.s32.totalorder %s19, 1
      %p142 = scmp.ne.s32.totalorder %s137, %s139
      %p143 = scmp.eq.s32.totalorder %s19, 0
      %p144 = por %p142, %p143
      %p145 = scmp.ne.s32.totalorder %s137, %s139
      %p146 = scmp.eq.s32.totalorder %s24, 1
      %p147 = por %p145, %p146
      %p148 = scmp.ne.s32.totalorder %s139, %s140
      %p149 = scmp.eq.s32.totalorder %s24, 0
      %p150 = por %p148, %p149
      %p151 = scmp.ne.s32.totalorder %s139, %s140
      %p152 = scmp.eq.s32.totalorder %s25, 1
      %p153 = por %p151, %p152
      %p155 = scmp.ne.s32.totalorder %s140, %s154
      %p156 = scmp.eq.s32.totalorder %s25, 0
      %p157 = por %p155, %p156
      %s159 = sadd.s32 %s158, 1
      %p162 = scmp.eq.s32.totalorder %s19, 1
      %p163 = scmp.ne.s32.totalorder %s158, %s160
      %p164 = scmp.eq.s32.totalorder %s19, 0
      %p165 = por %p163, %p164
      %p166 = scmp.ne.s32.totalorder %s158, %s160
      %p167 = scmp.eq.s32.totalorder %s24, 1
      %p168 = por %p166, %p167
      %p169 = scmp.ne.s32.totalorder %s160, %s161
      %p170 = scmp.eq.s32.totalorder %s24, 0
      %p171 = por %p169, %p170
      %p172 = scmp.ne.s32.totalorder %s160, %s161
      %p173 = scmp.eq.s32.totalorder %s25, 1
      %p174 = por %p172, %p173
      %p176 = scmp.ne.s32.totalorder %s161, %s175
      %p177 = scmp.eq.s32.totalorder %s25, 0
      %p178 = por %p176, %p177
      %s180 = sadd.s32 %s179, 1
      %p183 = scmp.eq.s32.totalorder %s19, 1
      %p184 = scmp.ne.s32.totalorder %s179, %s181
      %p185 = scmp.eq.s32.totalorder %s19, 0
      %p186 = por %p184, %p185
      %p187 = scmp.ne.s32.totalorder %s179, %s181
      %p188 = scmp.eq.s32.totalorder %s24, 1
      %p189 = por %p187, %p188
      %p190 = scmp.ne.s32.totalorder %s181, %s182
      %p191 = scmp.eq.s32.totalorder %s24, 0
      %p192 = por %p190, %p191
      %p193 = scmp.ne.s32.totalorder %s181, %s182
      %p194 = scmp.eq.s32.totalorder %s25, 1
      %p195 = por %p193, %p194
      %p197 = scmp.ne.s32.totalorder %s182, %s196
      %p198 = scmp.eq.s32.totalorder %s25, 0
      %p199 = por %p197, %p198
      %s201 = sadd.s32 %s200, 1
      %p204 = scmp.eq.s32.totalorder %s19, 1
      %p205 = scmp.ne.s32.totalorder %s200, %s202
      %p206 = scmp.eq.s32.totalorder %s19, 0
      %p207 = por %p205, %p206
      %p208 = scmp.ne.s32.totalorder %s200, %s202
      %p209 = scmp.eq.s32.totalorder %s24, 1
      %p210 = por %p208, %p209
      %p211 = scmp.ne.s32.totalorder %s202, %s203
      %p212 = scmp.eq.s32.totalorder %s24, 0
      %p213 = por %p211, %p212
      %p214 = scmp.ne.s32.totalorder %s202, %s203
      %p215 = scmp.eq.s32.totalorder %s25, 1
      %p216 = por %p214, %p215
      %p218 = scmp.ne.s32.totalorder %s203, %s217
      %p219 = scmp.eq.s32.totalorder %s25, 0
      %p220 = por %p218, %p219
      %s222 = sadd.s32 %s221, 1
      %p225 = scmp.eq.s32.totalorder %s19, 1
      %p226 = scmp.ne.s32.totalorder %s221, %s223
      %p227 = scmp.eq.s32.totalorder %s19, 0
      %p228 = por %p226, %p227
      %p229 = scmp.ne.s32.totalorder %s221, %s223
      %p230 = scmp.eq.s32.totalorder %s24, 1
      %p231 = por %p229, %p230
      %p232 = scmp.ne.s32.totalorder %s223, %s224
      %p233 = scmp.eq.s32.totalorder %s24, 0
      %p234 = por %p232, %p233
      %p235 = scmp.ne.s32.totalorder %s223, %s224
      %p236 = scmp.eq.s32.totalorder %s25, 1
      %p237 = por %p235, %p236
      %p239 = scmp.ne.s32.totalorder %s224, %s238
      %p240 = scmp.eq.s32.totalorder %s25, 0
      %p241 = por %p239, %p240
      %s242 = ssub.s32 %s19, %s26
      %p243 = scmp.eq.s32.totalorder %s242, 0
      %s245 = sadd.s32 %s244, 1
      %s246 = scalar_select %p243, %s244, %s245
      %p249 = pneg %p243
      %p250 = scmp.eq.s32.totalorder %s19, 1
      %p251 = por %p249, %p250
      %p252 = scmp.ne.s32.totalorder %s244, %s247
      %p253 = scmp.eq.s32.totalorder %s19, 0
      %p254 = por %p252, %p253
      %p255 = scmp.ne.s32.totalorder %s244, %s247
      %p256 = scmp.eq.s32.totalorder %s24, 1
      %p257 = por %p255, %p256
      %p258 = scmp.ne.s32.totalorder %s247, %s248
      %p259 = scmp.eq.s32.totalorder %s24, 0
      %p260 = por %p258, %p259
      %p261 = scmp.ne.s32.totalorder %s247, %s248
      %p262 = scmp.eq.s32.totalorder %s25, 1
      %p263 = por %p261, %p262
      %p265 = scmp.ne.s32.totalorder %s248, %s264
      %p266 = scmp.eq.s32.totalorder %s25, 0
      %p267 = por %p265, %p266
      %p268 = scmp.le.s32.totalorder 1, %s19
      %p269 = scmp.lt.s32.totalorder %s19, 3
      %p270 = pnand %p268, %p269
      %p271 = pneg %p270
      // Predicated region
      $region9: #{tpu_custom_call.1} parent=5 // pred_check
        _
      $region10: #{tpu_custom_call.1} parent=5 // pred_check_branch
        %273 = sbr.rel (%p270) target = $region12
      $region11: #{tpu_custom_call.1} parent=5 // pred_region
        %s274 = ssub.s32 %s19, 1
        // Predicated region
        $region13: #{tpu_custom_call.1} parent=11 // pred_check
          %p275 = pneg %p66
        $region14: #{tpu_custom_call.1} parent=11 // pred_check_branch
          %277 = sbr.rel (%p275) target = $region16
        $region15: #{tpu_custom_call.1} parent=11 // pred_region
          _
        $region16: #{tpu_custom_call.1} parent=11 // pred_fallthru
          _
        // Predicated region
        $region17: #{tpu_custom_call.1} parent=11 // pred_check
          %p278 = pneg %p87
        $region18: #{tpu_custom_call.1} parent=11 // pred_check_branch
          %280 = sbr.rel (%p278) target = $region20
        $region19: #{tpu_custom_call.1} parent=11 // pred_region
          _
        $region20: #{tpu_custom_call.1} parent=11 // pred_fallthru
          _
        // Predicated region
        $region21: #{tpu_custom_call.1} parent=11 // pred_check
          %p281 = pneg %p108
        $region22: #{tpu_custom_call.1} parent=11 // pred_check_branch
          %283 = sbr.rel (%p281) target = $region24
        $region23: #{tpu_custom_call.1} parent=11 // pred_region
          _
        $region24: #{tpu_custom_call.1} parent=11 // pred_fallthru
          _
        // Predicated region
        $region25: #{tpu_custom_call.1} parent=11 // pred_check
          %p284 = pneg %p129
        $region26: #{tpu_custom_call.1} parent=11 // pred_check_branch
          %286 = sbr.rel (%p284) target = $region28
        $region27: #{tpu_custom_call.1} parent=11 // pred_region
          _
        $region28: #{tpu_custom_call.1} parent=11 // pred_fallthru
          _
        // Predicated region
        $region29: #{tpu_custom_call.1} parent=11 // pred_check
          %p287 = pneg %p150
        $region30: #{tpu_custom_call.1} parent=11 // pred_check_branch
          %289 = sbr.rel (%p287) target = $region32
        $region31: #{tpu_custom_call.1} parent=11 // pred_region
          _
        $region32: #{tpu_custom_call.1} parent=11 // pred_fallthru
          _
        // Predicated region
        $region33: #{tpu_custom_call.1} parent=11 // pred_check
          %p290 = pneg %p171
        $region34: #{tpu_custom_call.1} parent=11 // pred_check_branch
          %292 = sbr.rel (%p290) target = $region36
        $region35: #{tpu_custom_call.1} parent=11 // pred_region
          _
        $region36: #{tpu_custom_call.1} parent=11 // pred_fallthru
          _
        // Predicated region
        $region37: #{tpu_custom_call.1} parent=11 // pred_check
          %p293 = pneg %p192
        $region38: #{tpu_custom_call.1} parent=11 // pred_check_branch
          %295 = sbr.rel (%p293) target = $region40
        $region39: #{tpu_custom_call.1} parent=11 // pred_region
          _
        $region40: #{tpu_custom_call.1} parent=11 // pred_fallthru
          _
        // Predicated region
        $region41: #{tpu_custom_call.1} parent=11 // pred_check
          %p296 = pneg %p213
        $region42: #{tpu_custom_call.1} parent=11 // pred_check_branch
          %298 = sbr.rel (%p296) target = $region44
        $region43: #{tpu_custom_call.1} parent=11 // pred_region
          _
        $region44: #{tpu_custom_call.1} parent=11 // pred_fallthru
          _
        // Predicated region
        $region45: #{tpu_custom_call.1} parent=11 // pred_check
          %p299 = pneg %p234
        $region46: #{tpu_custom_call.1} parent=11 // pred_check_branch
          %301 = sbr.rel (%p299) target = $region48
        $region47: #{tpu_custom_call.1} parent=11 // pred_region
          _
        $region48: #{tpu_custom_call.1} parent=11 // pred_fallthru
          _
      $region12: #{tpu_custom_call.1} parent=5 // pred_fallthru
        _
      %p302 = scmp.lt.s32.totalorder %s19, 2
      // Predicated region
      $region49: #{tpu_custom_call.1} parent=5 // pred_check
        %p303 = pneg %p302
      $region50: #{tpu_custom_call.1} parent=5 // pred_check_branch
        %305 = sbr.rel (%p303) target = $region52
      $region51: #{tpu_custom_call.1} parent=5 // pred_region
        // Predicated region
        $region53: #{tpu_custom_call.1} parent=51 // pred_check
          %p306 = pneg %p39
        $region54: #{tpu_custom_call.1} parent=51 // pred_check_branch
          %308 = sbr.rel (%p306) target = $region56
        $region55: #{tpu_custom_call.1} parent=51 // pred_region
          %p309 = scmp.lt.s32.totalorder %s19, 1
          %s310 = scalar_select %p309, %s19, 1
          %s311 = smul.addr %s310, 2
          %s312 = smul.addr %s311, 8
          %s313 = scalar_lea.vmem %s0, %s312
        $region56: #{tpu_custom_call.1} parent=51 // pred_fallthru
          _
      $region52: #{tpu_custom_call.1} parent=5 // pred_fallthru
        _
      %p314 = scmp.le.s32.totalorder 1, %s19
      %p315 = scmp.lt.s32.totalorder %s19, 3
      %p316 = pnand %p314, %p315
      %p317 = pneg %p316
      // Predicated region
      $region57: #{tpu_custom_call.1} parent=5 // pred_check
        _
      $region58: #{tpu_custom_call.1} parent=5 // pred_check_branch
        %319 = sbr.rel (%p316) target = $region60
      $region59: #{tpu_custom_call.1} parent=5 // pred_region
        %s320 = ssub.s32 %s19, 1
        %p321 = scmp.lt.s32.totalorder %s24, 1
        %s322 = scalar_select %p321, %s24, 1
        %s323 = smul.addr %s322, 2
        %s324 = smul.addr %s323, 8
        %s325 = scalar_lea.vmem %s0, %s324
        %p326 = pneg %p45
        %p327 = pneg %p42
        %p328 = pneg %p66
        %p329 = pneg %p63
        %p330 = pneg %p87
        %p331 = pneg %p84
        %p332 = pneg %p108
        %p333 = pneg %p105
        %p334 = pneg %p129
        %p335 = pneg %p126
        %p336 = pneg %p150
        %p337 = pneg %p147
        %p338 = pneg %p171
        %p339 = pneg %p168
        %p340 = pneg %p192
        %p341 = pneg %p189
        %p342 = pneg %p213
        %p343 = pneg %p210
        %p344 = pneg %p234
        %p345 = pneg %p231
        %p346 = pneg %p260
        %p347 = pneg %p257
        %s348 = sand.u32 %s247, 1
        %s349 = scalar_lea.sflag [#allocation3], %s348
        %s350 = sand.u32 %s247, 1
        %s351 = smul.addr %s350, 32
        %s352 = scalar_lea.vmem [#allocation2], %s351
        %p353 = scmp.lt.s32.totalorder %s24, 1
        %s354 = scalar_select %p353, %s24, 1
        %s355 = smul.addr %s354, 2
        %s356 = smul.addr %s355, 8
        %s357 = scalar_lea.vmem %s0, %s356
        %v359 = vld [vmem:[%s357] sm:$0xff]
        %v360 = vld [vmem:[%s357 + $0x8] sm:$0xff]
        %361 = vrot.lane.b32.xlu0 %v359, 17
        %v362 = vpop.permute.xlu0 %361
        %363 = vrot.lane.b32.xlu0 %v360, 17
        %v364 = vpop.permute.xlu0 %363
        %v365 = vlaneseq
        %v366 = vand.u32 %v365, 127
        %vm367 = vcmp.lt.s32.totalorder %v366, 17
        %v368 = vsel %vm367, %v362, %v364
        %v369 = vsel %vm367, %v364, %v362
        %v370 = vld [vmem:[%s1] ss:$8 sm:$0x3]
        %v372 = vlaneseq
        %v373 = vshrl.u32 %v372, 7
        %v374 = vsub.s32 0, %v373
        %v375 = vrot.slane %v370, %v374
        %v376 = vlaneseq
        %v377 = vshrl.u32 %v376, 7
        %v378 = vsub.s32 1, %v377
        %v379 = vrot.slane %v370, %v378
        %v382 = vmul.f32 %v369, %v375
        %v383 = vmul.f32 %v368, %v379
        %384 = vrot.lane.b32.xlu0 %v359, 16
        %v385 = vpop.permute.xlu0 %384
        %386 = vrot.lane.b32.xlu0 %v360, 16
        %v387 = vpop.permute.xlu0 %386
        %vm388 = vcmp.lt.s32.totalorder %v366, 16
        %v389 = vsel %vm388, %v385, %v387
        %v390 = vsel %vm388, %v387, %v385
        %s391 = scalar_lea.vmem %s1, 1
        %v392 = vld [vmem:[%s391] ss:$8 sm:$0x3]
        %v394 = vlaneseq
        %v395 = vshrl.u32 %v394, 7
        %v396 = vsub.s32 0, %v395
        %v397 = vrot.slane %v392, %v396
        %v398 = vlaneseq
        %v399 = vshrl.u32 %v398, 7
        %v400 = vsub.s32 1, %v399
        %v401 = vrot.slane %v392, %v400
        %v404 = vmul.f32 %v390, %v397
        %v405 = vmul.f32 %v389, %v401
        %406 = vrot.lane.b32.xlu0 %v359, 15
        %v407 = vpop.permute.xlu0 %406
        %408 = vrot.lane.b32.xlu0 %v360, 15
        %v409 = vpop.permute.xlu0 %408
        %vm410 = vcmp.lt.s32.totalorder %v366, 15
        %v411 = vsel %vm410, %v407, %v409
        %v412 = vsel %vm410, %v409, %v407
        %s413 = scalar_lea.vmem %s1, 2
        %v414 = vld [vmem:[%s413] ss:$8 sm:$0x3]
        %v416 = vlaneseq
        %v417 = vshrl.u32 %v416, 7
        %v418 = vsub.s32 0, %v417
        %v419 = vrot.slane %v414, %v418
        %v420 = vlaneseq
        %v421 = vshrl.u32 %v420, 7
        %v422 = vsub.s32 1, %v421
        %v423 = vrot.slane %v414, %v422
        %v426 = vmul.f32 %v412, %v419
        %v427 = vmul.f32 %v411, %v423
        %428 = vrot.lane.b32.xlu0 %v359, 1
        %v429 = vpop.permute.xlu0 %428
        %430 = vrot.lane.b32.xlu0 %v360, 1
        %v431 = vpop.permute.xlu0 %430
        %vm432 = vcmp.lt.s32.totalorder %v366, 1
        %v433 = vsel %vm432, %v429, %v431
        %v434 = vsel %vm432, %v431, %v429
        %s435 = scalar_lea.vmem %s1, 3
        %v436 = vld [vmem:[%s435] ss:$8 sm:$0x3]
        %v438 = vlaneseq
        %v439 = vshrl.u32 %v438, 7
        %v440 = vsub.s32 0, %v439
        %v441 = vrot.slane %v436, %v440
        %v442 = vlaneseq
        %v443 = vshrl.u32 %v442, 7
        %v444 = vsub.s32 1, %v443
        %v445 = vrot.slane %v436, %v444
        %v448 = vmul.f32 %v434, %v441
        %v449 = vmul.f32 %v433, %v445
        %450 = vrot.lane.b32.xlu0 %v359, 127
        %v451 = vpop.permute.xlu0 %450
        %452 = vrot.lane.b32.xlu0 %v360, 127
        %v453 = vpop.permute.xlu0 %452
        %vm454 = vcmp.lt.s32.totalorder %v366, 127
        %v455 = vsel %vm454, %v451, %v453
        %v456 = vsel %vm454, %v453, %v451
        %s457 = scalar_lea.vmem %s1, 5
        %v458 = vld [vmem:[%s457] ss:$8 sm:$0x3]
        %v460 = vlaneseq
        %v461 = vshrl.u32 %v460, 7
        %v462 = vsub.s32 0, %v461
        %v463 = vrot.slane %v458, %v462
        %v464 = vlaneseq
        %v465 = vshrl.u32 %v464, 7
        %v466 = vsub.s32 1, %v465
        %v467 = vrot.slane %v458, %v466
        %v470 = vmul.f32 %v455, %v463
        %v471 = vmul.f32 %v456, %v467
        %472 = vrot.lane.b32.xlu0 %v359, 113
        %v473 = vpop.permute.xlu0 %472
        %474 = vrot.lane.b32.xlu0 %v360, 113
        %v475 = vpop.permute.xlu0 %474
        %vm476 = vcmp.lt.s32.totalorder %v366, 113
        %v477 = vsel %vm476, %v473, %v475
        %v478 = vsel %vm476, %v475, %v473
        %s479 = scalar_lea.vmem %s1, 6
        %v480 = vld [vmem:[%s479] ss:$8 sm:$0x3]
        %v482 = vlaneseq
        %v483 = vshrl.u32 %v482, 7
        %v484 = vsub.s32 0, %v483
        %v485 = vrot.slane %v480, %v484
        %v486 = vlaneseq
        %v487 = vshrl.u32 %v486, 7
        %v488 = vsub.s32 1, %v487
        %v489 = vrot.slane %v480, %v488
        %v492 = vmul.f32 %v477, %v485
        %v493 = vmul.f32 %v478, %v489
        %494 = vrot.lane.b32.xlu0 %v359, 112
        %v495 = vpop.permute.xlu0 %494
        %496 = vrot.lane.b32.xlu0 %v360, 112
        %v497 = vpop.permute.xlu0 %496
        %vm498 = vcmp.lt.s32.totalorder %v366, 112
        %v499 = vsel %vm498, %v495, %v497
        %v500 = vsel %vm498, %v497, %v495
        %s501 = scalar_lea.vmem %s1, 7
        %v502 = vld [vmem:[%s501] ss:$8 sm:$0x3]
        %v504 = vlaneseq
        %v505 = vshrl.u32 %v504, 7
        %v506 = vsub.s32 0, %v505
        %v507 = vrot.slane %v502, %v506
        %v508 = vlaneseq
        %v509 = vshrl.u32 %v508, 7
        %v510 = vsub.s32 1, %v509
        %v511 = vrot.slane %v502, %v510
        %v514 = vmul.f32 %v499, %v507
        %v515 = vmul.f32 %v500, %v511
        %516 = vrot.lane.b32.xlu0 %v359, 111
        %v517 = vpop.permute.xlu0 %516
        %518 = vrot.lane.b32.xlu0 %v360, 111
        %v519 = vpop.permute.xlu0 %518
        %vm520 = vcmp.lt.s32.totalorder %v366, 111
        %v521 = vsel %vm520, %v517, %v519
        %v522 = vsel %vm520, %v519, %v517
        %s523 = scalar_lea.vmem %s1, 16
        %v524 = vld [vmem:[%s523] ss:$8 sm:$0x3]
        %v526 = vlaneseq
        %v527 = vshrl.u32 %v526, 7
        %v528 = vsub.s32 0, %v527
        %v529 = vrot.slane %v524, %v528
        %v530 = vlaneseq
        %v531 = vshrl.u32 %v530, 7
        %v532 = vsub.s32 1, %v531
        %v533 = vrot.slane %v524, %v532
        %v536 = vmul.f32 %v521, %v529
        %v537 = vmul.f32 %v522, %v533
        %v538 = vpack.c.bf16 %v404, %v382
        %v539 = vpack.c.bf16 %v405, %v383
        %v540 = vpack.c.bf16 %v448, %v426
        %v541 = vpack.c.bf16 %v449, %v427
        %v542 = vpack.c.bf16 %v470, %v359
        %v543 = vpack.c.bf16 %v471, %v360
        %v544 = vpack.c.bf16 %v514, %v492
        %v545 = vpack.c.bf16 %v515, %v493
        %v546 = vpack.c.bf16 %v536, %v536
        %v547 = vpack.c.bf16 %v537, %v537
        %v548 = vld [vmem:[%s2] sm:$0xf]
        %v549 = vld [vmem:[%s2 + $0x4] sm:$0xf]
        %v550 = vld [vmem:[%s2 + $0x8] sm:$0xf]
        %v551 = vld [vmem:[%s2 + $0xc] sm:$0xf]
        %v552 = vld [vmem:[%s3] sm:$0xff]
        %v553 = vld [vmem:[%s3 + $0x8] sm:$0xff]
        %v554 = vld [vmem:[%s3 + $0x10] sm:$0xff]
        %v555 = vld [vmem:[%s3 + $0x18] sm:$0xff]
        %557 = vset.pattern.permute.xlu0 0
        %558 = vperm.xlu0 %557, %v552
        %v559 = vpop.permute.xlu0 %558
        %562 = vset.pattern.permute.xlu0 0
        %563 = vperm.xlu0 %562, %v553
        %v564 = vpop.permute.xlu0 %563
        %567 = vset.pattern.permute.xlu0 0
        %568 = vperm.xlu0 %567, %v554
        %v569 = vpop.permute.xlu0 %568
        %572 = vset.pattern.permute.xlu0 0
        %573 = vperm.xlu0 %572, %v555
        %v574 = vpop.permute.xlu0 %573
        %v580 = vunpack.c.l.b16 %v548
        %v581 = vunpack.c.l.b16 %v549
        %v582 = vunpack.c.l.b16 %v550
        %v583 = vunpack.c.l.b16 %v551
        %v584 = vpack.c.b16 %v581, %v580
        %v585 = vpack.c.b16 %v583, %v582
        %vm586 = vcmask 588800
        %v588 = vsel %vm586, %v584, 0
        %v591 = vsel %vm586, %v585, 0
        %vm593 = vcmask 1043456
        %v595 = vsel %vm593, %v546, 0
        %v598 = vsel %vm593, %v547, 0
        %600 = vmatprep.subr.bf16.mxu0 %v539
        %601 = vmatpush1.bf16.msra.mxu0 %v538
        %602 = vmatprep.subr.bf16.mxu0 %v541
        %603 = vmatpush1.bf16.msra.mxu0 %v540
        %604 = vmatprep.subr.bf16.mxu0 %v543
        %605 = vmatpush1.bf16.msra.mxu0 %v542
        %606 = vmatprep.subr.bf16.mxu0 %v545
        %607 = vmatpush1.bf16.msra.mxu0 %v544
        %608 = vmatprep.subr.bf16.mxu0 %v598
        %609 = vmatpush1.bf16.msra.mxu0 %v595
        %610 = vmatprep.subr.bf16.mxu0 0
        %611 = vmatpush1.bf16.msra.mxu0 0
        %612 = vmatprep.subr.bf16.mxu0 0
        %613 = vmatpush1.bf16.msra.mxu0 0
        %614 = vmatprep.subr.bf16.mxu0 0
        %615 = vmatpush1.bf16.msra.mxu0 0
        %616 = vmatprep.subr.bf16.mxu0 0
        %617 = vmatpush1.bf16.msra.mxu0 0
        %618 = vmatprep.subr.bf16.mxu0 0
        %619 = vmatpush1.bf16.msra.mxu0 0
        %620 = vmatprep.subr.bf16.mxu0 0
        %621 = vmatpush1.bf16.msra.mxu0 0
        %622 = vmatprep.subr.bf16.mxu0 0
        %623 = vmatpush1.bf16.msra.mxu0 0
        %624 = vmatprep.subr.bf16.mxu0 0
        %625 = vmatpush1.bf16.msra.mxu0 0
        %626 = vmatprep.subr.bf16.mxu0 0
        %627 = vmatpush1.bf16.msra.mxu0 0
        %628 = vmatprep.subr.bf16.mxu0 0
        %629 = vmatpush1.bf16.msra.mxu0 0
        %630 = vmatprep.subr.bf16.mxu0 0
        %631 = vmatpush1.bf16.msra.mxu0 0
        %632 = vmatprep.mubr.bf16.mxu0 0
        %633 = vmatmul.mubr.bf16.gmra.mrb[0].mxu0 %v588
        %v634 = vpop.f32.mrb[0].mxu0
        %v635 = vadd.f32 %v559, %v634
        %v636 = vpop.f32.mrb[0].mxu0
        %v637 = vadd.f32 %v559, %v636
        %v638 = vpop.f32.mrb[0].mxu0
        %v639 = vadd.f32 %v564, %v638
        %v640 = vpop.f32.mrb[0].mxu0
        %v641 = vadd.f32 %v564, %v640
        %642 = vmatprep.mubr.bf16.mxu0 0
        %643 = vmatmul.mubr.bf16.gmra.mrb[0].mxu0 %v591
        %v644 = vpop.f32.mrb[0].mxu0
        %v645 = vadd.f32 %v569, %v644
        %v646 = vpop.f32.mrb[0].mxu0
        %v647 = vadd.f32 %v569, %v646
        %v648 = vpop.f32.mrb[0].mxu0
        %v649 = vadd.f32 %v574, %v648
        %v650 = vpop.f32.mrb[0].mxu0
        %v651 = vadd.f32 %v574, %v650
        %652 = vdwg.mxu0
        %v653 = vmax.f32 %v635, 0.0
        %v654 = vmax.f32 %v637, 0.0
        %v655 = vmax.f32 %v639, 0.0
        %v656 = vmax.f32 %v641, 0.0
        %657 = vrot.lane.b32.xlu0 %v653, 17
        %v658 = vpop.permute.xlu0 %657
        %659 = vrot.lane.b32.xlu0 %v655, 17
        %v660 = vpop.permute.xlu0 %659
        %661 = vrot.lane.b32.xlu0 %v654, 17
        %v662 = vpop.permute.xlu0 %661
        %663 = vrot.lane.b32.xlu0 %v656, 17
        %v664 = vpop.permute.xlu0 %663
        %v665 = vsel %vm367, %v658, %v662
        %v666 = vsel %vm367, %v660, %v664
        %v667 = vsel %vm367, %v662, %v658
        %v668 = vsel %vm367, %v664, %v660
        %v669 = vmul.f32 %v667, %v375
        %v670 = vmul.f32 %v665, %v379
        %v671 = vmul.f32 %v668, %v375
        %v672 = vmul.f32 %v666, %v379
        %673 = vrot.lane.b32.xlu0 %v653, 16
        %v674 = vpop.permute.xlu0 %673
        %675 = vrot.lane.b32.xlu0 %v655, 16
        %v676 = vpop.permute.xlu0 %675
        %677 = vrot.lane.b32.xlu0 %v654, 16
        %v678 = vpop.permute.xlu0 %677
        %679 = vrot.lane.b32.xlu0 %v656, 16
        %v680 = vpop.permute.xlu0 %679
        %v681 = vsel %vm388, %v674, %v678
        %v682 = vsel %vm388, %v676, %v680
        %v683 = vsel %vm388, %v678, %v674
        %v684 = vsel %vm388, %v680, %v676
        %v685 = vmul.f32 %v683, %v397
        %v686 = vmul.f32 %v681, %v401
        %v687 = vmul.f32 %v684, %v397
        %v688 = vmul.f32 %v682, %v401
        %689 = vrot.lane.b32.xlu0 %v653, 15
        %v690 = vpop.permute.xlu0 %689
        %691 = vrot.lane.b32.xlu0 %v655, 15
        %v692 = vpop.permute.xlu0 %691
        %693 = vrot.lane.b32.xlu0 %v654, 15
        %v694 = vpop.permute.xlu0 %693
        %695 = vrot.lane.b32.xlu0 %v656, 15
        %v696 = vpop.permute.xlu0 %695
        %v697 = vsel %vm410, %v690, %v694
        %v698 = vsel %vm410, %v692, %v696
        %v699 = vsel %vm410, %v694, %v690
        %v700 = vsel %vm410, %v696, %v692
        %v701 = vmul.f32 %v699, %v419
        %v702 = vmul.f32 %v697, %v423
        %v703 = vmul.f32 %v700, %v419
        %v704 = vmul.f32 %v698, %v423
        %705 = vrot.lane.b32.xlu0 %v653, 1
        %v706 = vpop.permute.xlu0 %705
        %707 = vrot.lane.b32.xlu0 %v655, 1
        %v708 = vpop.permute.xlu0 %707
        %709 = vrot.lane.b32.xlu0 %v654, 1
        %v710 = vpop.permute.xlu0 %709
        %711 = vrot.lane.b32.xlu0 %v656, 1
        %v712 = vpop.permute.xlu0 %711
        %v713 = vsel %vm432, %v706, %v710
        %v714 = vsel %vm432, %v708, %v712
        %v715 = vsel %vm432, %v710, %v706
        %v716 = vsel %vm432, %v712, %v708
        %v717 = vmul.f32 %v715, %v441
        %v718 = vmul.f32 %v713, %v445
        %v719 = vmul.f32 %v716, %v441
        %v720 = vmul.f32 %v714, %v445
        %721 = vrot.lane.b32.xlu0 %v653, 127
        %v722 = vpop.permute.xlu0 %721
        %723 = vrot.lane.b32.xlu0 %v655, 127
        %v724 = vpop.permute.xlu0 %723
        %725 = vrot.lane.b32.xlu0 %v654, 127
        %v726 = vpop.permute.xlu0 %725
        %727 = vrot.lane.b32.xlu0 %v656, 127
        %v728 = vpop.permute.xlu0 %727
        %v729 = vsel %vm454, %v722, %v726
        %v730 = vsel %vm454, %v724, %v728
        %v731 = vsel %vm454, %v726, %v722
        %v732 = vsel %vm454, %v728, %v724
        %v733 = vmul.f32 %v729, %v463
        %v734 = vmul.f32 %v731, %v467
        %v735 = vmul.f32 %v730, %v463
        %v736 = vmul.f32 %v732, %v467
        %737 = vrot.lane.b32.xlu0 %v653, 113
        %v738 = vpop.permute.xlu0 %737
        %739 = vrot.lane.b32.xlu0 %v655, 113
        %v740 = vpop.permute.xlu0 %739
        %741 = vrot.lane.b32.xlu0 %v654, 113
        %v742 = vpop.permute.xlu0 %741
        %743 = vrot.lane.b32.xlu0 %v656, 113
        %v744 = vpop.permute.xlu0 %743
        %v745 = vsel %vm476, %v738, %v742
        %v746 = vsel %vm476, %v740, %v744
        %v747 = vsel %vm476, %v742, %v738
        %v748 = vsel %vm476, %v744, %v740
        %v749 = vmul.f32 %v745, %v485
        %v750 = vmul.f32 %v747, %v489
        %v751 = vmul.f32 %v746, %v485
        %v752 = vmul.f32 %v748, %v489
        %753 = vrot.lane.b32.xlu0 %v653, 112
        %v754 = vpop.permute.xlu0 %753
        %755 = vrot.lane.b32.xlu0 %v655, 112
        %v756 = vpop.permute.xlu0 %755
        %757 = vrot.lane.b32.xlu0 %v654, 112
        %v758 = vpop.permute.xlu0 %757
        %759 = vrot.lane.b32.xlu0 %v656, 112
        %v760 = vpop.permute.xlu0 %759
        %v761 = vsel %vm498, %v754, %v758
        %v762 = vsel %vm498, %v756, %v760
        %v763 = vsel %vm498, %v758, %v754
        %v764 = vsel %vm498, %v760, %v756
        %v765 = vmul.f32 %v761, %v507
        %v766 = vmul.f32 %v763, %v511
        %v767 = vmul.f32 %v762, %v507
        %v768 = vmul.f32 %v764, %v511
        %769 = vrot.lane.b32.xlu0 %v653, 111
        %v770 = vpop.permute.xlu0 %769
        %771 = vrot.lane.b32.xlu0 %v655, 111
        %v772 = vpop.permute.xlu0 %771
        %773 = vrot.lane.b32.xlu0 %v654, 111
        %v774 = vpop.permute.xlu0 %773
        %775 = vrot.lane.b32.xlu0 %v656, 111
        %v776 = vpop.permute.xlu0 %775
        %v777 = vsel %vm520, %v770, %v774
        %v778 = vsel %vm520, %v772, %v776
        %v779 = vsel %vm520, %v774, %v770
        %v780 = vsel %vm520, %v776, %v772
        %v781 = vmul.f32 %v777, %v529
        %v782 = vmul.f32 %v779, %v533
        %v783 = vmul.f32 %v778, %v529
        %v784 = vmul.f32 %v780, %v533
        %v785 = vpack.c.bf16 %v671, %v669
        %v786 = vpack.c.bf16 %v672, %v670
        %v787 = vpack.c.bf16 %v687, %v685
        %v788 = vpack.c.bf16 %v688, %v686
        %v789 = vpack.c.bf16 %v703, %v701
        %v790 = vpack.c.bf16 %v704, %v702
        %v791 = vpack.c.bf16 %v719, %v717
        %v792 = vpack.c.bf16 %v720, %v718
        %v793 = vpack.c.bf16 %v655, %v653
        %v794 = vpack.c.bf16 %v656, %v654
        %v795 = vpack.c.bf16 %v735, %v733
        %v796 = vpack.c.bf16 %v736, %v734
        %v797 = vpack.c.bf16 %v751, %v749
        %v798 = vpack.c.bf16 %v752, %v750
        %v799 = vpack.c.bf16 %v767, %v765
        %v800 = vpack.c.bf16 %v768, %v766
        %v801 = vpack.c.bf16 %v783, %v781
        %v802 = vpack.c.bf16 %v784, %v782
        %v803 = vld [vmem:[%s4] sm:$0xff]
        %v804 = vld [vmem:[%s4 + $0x8] sm:$0xff]
        %v805 = vld [vmem:[%s5] sm:$0xff]
        %v806 = vld [vmem:[%s5 + $0x8] sm:$0xff]
        %808 = vset.pattern.permute.xlu0 0
        %809 = vperm.xlu0 %808, %v805
        %v810 = vpop.permute.xlu0 %809
        %813 = vset.pattern.permute.xlu0 0
        %814 = vperm.xlu0 %813, %v806
        %v815 = vpop.permute.xlu0 %814
        %v819 = vunpack.c.l.b16 %v803
        %v820 = vunpack.c.h.b16 %v803
        %v821 = vunpack.c.l.b16 %v804
        %v822 = vunpack.c.h.b16 %v804
        %v823 = vpack.c.b16 %v821, %v819
        %v824 = vpack.c.b16 %v822, %v820
        %vm826 = vcmask 130048
        %v828 = vsel %vm826, %v824, 0
        %830 = vmatprep.subr.bf16.mxu0 %v786
        %831 = vmatpush1.bf16.msra.mxu0 %v785
        %832 = vmatprep.subr.bf16.mxu0 %v788
        %833 = vmatpush1.bf16.msra.mxu0 %v787
        %834 = vmatprep.subr.bf16.mxu0 %v790
        %835 = vmatpush1.bf16.msra.mxu0 %v789
        %836 = vmatprep.subr.bf16.mxu0 %v792
        %837 = vmatpush1.bf16.msra.mxu0 %v791
        %838 = vmatprep.subr.bf16.mxu0 %v794
        %839 = vmatpush1.bf16.msra.mxu0 %v793
        %840 = vmatprep.subr.bf16.mxu0 %v796
        %841 = vmatpush1.bf16.msra.mxu0 %v795
        %842 = vmatprep.subr.bf16.mxu0 %v798
        %843 = vmatpush1.bf16.msra.mxu0 %v797
        %844 = vmatprep.subr.bf16.mxu0 %v800
        %845 = vmatpush1.bf16.msra.mxu0 %v799
        %846 = vmatprep.subr.bf16.mxu0 %v802
        %847 = vmatpush1.bf16.msra.mxu0 %v801
        %848 = vmatprep.subr.bf16.mxu0 0
        %849 = vmatpush1.bf16.msra.mxu0 0
        %850 = vmatprep.subr.bf16.mxu0 0
        %851 = vmatpush1.bf16.msra.mxu0 0
        %852 = vmatprep.subr.bf16.mxu0 0
        %853 = vmatpush1.bf16.msra.mxu0 0
        %854 = vmatprep.subr.bf16.mxu0 0
        %855 = vmatpush1.bf16.msra.mxu0 0
        %856 = vmatprep.subr.bf16.mxu0 0
        %857 = vmatpush1.bf16.msra.mxu0 0
        %858 = vmatprep.subr.bf16.mxu0 0
        %859 = vmatpush1.bf16.msra.mxu0 0
        %860 = vmatprep.subr.bf16.mxu0 0
        %861 = vmatpush1.bf16.msra.mxu0 0
        %862 = vmatprep.mubr.bf16.mxu0 %v828
        %863 = vmatmul.mubr.bf16.gmra.mrb[0].mxu0 %v823
        %v864 = vpop.f32.mrb[0].mxu0
        %v865 = vadd.f32 %v810, %v864
        %v866 = vpop.f32.mrb[0].mxu0
        %v867 = vadd.f32 %v810, %v866
        %v868 = vpop.f32.mrb[0].mxu0
        %v869 = vadd.f32 %v815, %v868
        %v870 = vpop.f32.mrb[0].mxu0
        %v871 = vadd.f32 %v815, %v870
        %872 = vdwg.mxu0
        %v873 = vadd.f32 %v865, %v867
        %874 = vadd.xlane.f32.xlu0 %v873
        %v875 = vpop.xlane.xlu0 %874
        %v876 = vadd.f32 %v869, %v871
        %877 = vadd.xlane.f32.xlu0 %v876
        %v878 = vpop.xlane.xlu0 %877
        %v879 = vrcp.pop 256.0
        %v880 = vmul.f32 %v875, %v879
        %v881 = vmul.f32 %v878, %v879
        %v882 = vld [vmem:[%s6] sm:$0xff]
        %v883 = vld [vmem:[%s6 + $0x8] sm:$0xff]
        %v884 = vmul.f32 %v882, %v880
        %v885 = vmul.f32 %v883, %v881
        %vm886 = vcmask 15360
        %v887 = vsel %vm886, %v884, 0.0
        %v888 = vsel %vm886, %v885, 0.0
        %v889 = vadd.f32 %v887, %v888
        %v890 = vrot.slane %v889, 4
        %v891 = vadd.f32 %v889, %v890
        %v892 = vrot.slane %v891, 2
        %v893 = vadd.f32 %v891, %v892
        %v894 = vrot.slane %v893, 1
        %v895 = vadd.f32 %v893, %v894
        %v896 = vld [vmem:[%s7] sm:$0x1]
        %v897 = vadd.f32 %v895, %v896
        %v898 = vmax.f32 %v897, 0.0
        %v899 = vld [vmem:[%s8] sm:$0xff]
        %v900 = vld [vmem:[%s8 + $0x8] sm:$0xff]
        %v901 = vlaneseq
        %v902 = vshrl.u32 %v901, 7
        %v903 = vsub.s32 0, %v902
        %v904 = vrot.slane %v898, %v903
        %v905 = vmul.f32 %v899, %v904
        %v906 = vmul.f32 %v900, %v904
        %v907 = vsel %vm886, %v905, 0.0
        %908 = vadd.xlane.f32.xlu0 %v907
        %v909 = vpop.xlane.xlu0 %908
        %v910 = vsel %vm886, %v906, 0.0
        %911 = vadd.xlane.f32.xlu0 %v910
        %v912 = vpop.xlane.xlu0 %911
        %v913 = vld [vmem:[%s9] sm:$0xff]
        %v914 = vld [vmem:[%s9 + $0x8] sm:$0xff]
        %v915 = vadd.f32 %v909, %v913
        %v916 = vadd.f32 %v912, %v914
        %v917 = vxor.u32 %v915, 2147483648
        %v918 = vxor.u32 %v916, 2147483648
        %v919 = vmul.f32 %v917, 1.442695
        %v920 = vpow.pop %v919
        %v921 = vmul.f32 %v918, 1.442695
        %v922 = vpow.pop %v921
        %v923 = vadd.f32 %v920, 1.0
        %v924 = vadd.f32 %v922, 1.0
        %v925 = vrcp.pop %v923
        %v926 = vmul.f32 1.0, %v925
        %v927 = vrcp.pop %v924
        %v928 = vmul.f32 1.0, %v927
        %930 = vset.pattern.permute.xlu0 0
        %931 = vperm.xlu0 %930, %v926
        %v932 = vpop.permute.xlu0 %931
        %935 = vset.pattern.permute.xlu0 0
        %936 = vperm.xlu0 %935, %v928
        %v937 = vpop.permute.xlu0 %936
        %v939 = vmul.f32 %v865, %v932
        %v940 = vmul.f32 %v867, %v932
        %v941 = vmul.f32 %v869, %v937
        %v942 = vmul.f32 %v871, %v937
        %v943 = vadd.f32 %v939, %v645
        %v944 = vadd.f32 %v940, %v647
        %v945 = vadd.f32 %v941, %v649
        %v946 = vadd.f32 %v942, %v651
        %v947 = vmax.f32 %v943, 0.0
        %v948 = vmax.f32 %v944, 0.0
        %v949 = vmax.f32 %v945, 0.0
        %v950 = vmax.f32 %v946, 0.0
        %951 = vst [vmem:[%s352] sm:$0xff] %v947
        %952 = vst [vmem:[%s352 + $0x8] sm:$0xff] %v948
        %953 = vst [vmem:[%s352 + $0x10] sm:$0xff] %v949
        %954 = vst [vmem:[%s352 + $0x18] sm:$0xff] %v950
        %s955 = sand.u32 %s247, 1
        %s956 = scalar_lea.sflag [#allocation3], %s955
        %s957 = sand.u32 %s247, 1
        %s958 = smul.addr %s957, 32
        %s959 = scalar_lea.vmem [#allocation2], %s958
        // Predicated region
        $region61: #{tpu_custom_call.1} parent=59 // pred_check
          %p960 = pneg %p257
        $region62: #{tpu_custom_call.1} parent=59 // pred_check_branch
          %962 = sbr.rel (%p960) target = $region64
        $region63: #{tpu_custom_call.1} parent=59 // pred_region
          %s964 = ssub.s32 512, 512
          %965 = vsyncadd %s956, %s964
          %s966 = smul.addr %s24, 4
          %s967 = smul.addr %s966, 128
          %s968 = scalar_lea.hbm %s10, %s967
          %s969 = sshll.u32 %s959, 4
          %s970 = int_to_ptr.vmem [resolvable:$true] %s969
          %975 = dma.vmem_to_hbm [thread:$0]  %s970, 512, %s968, %s956, 256, 256, 16
        $region64: #{tpu_custom_call.1} parent=59 // pred_fallthru
          _
      $region60: #{tpu_custom_call.1} parent=5 // pred_fallthru
        _
      %p976 = scmp.le.s32.totalorder 2, %s19
      // Predicated region
      $region65: #{tpu_custom_call.1} parent=5 // pred_check
        %p977 = pneg %p976
      $region66: #{tpu_custom_call.1} parent=5 // pred_check_branch
        %979 = sbr.rel (%p977) target = $region68
      $region67: #{tpu_custom_call.1} parent=5 // pred_region
        %s980 = ssub.s32 %s19, 2
        // Predicated region
        $region69: #{tpu_custom_call.1} parent=67 // pred_check
          %p981 = pneg %p263
        $region70: #{tpu_custom_call.1} parent=67 // pred_check_branch
          %983 = sbr.rel (%p981) target = $region72
        $region71: #{tpu_custom_call.1} parent=67 // pred_region
          %s984 = sand.u32 %s248, 1
          %s985 = scalar_lea.sflag [#allocation3], %s984
          %s986 = sand.u32 %s248, 1
          %s987 = smul.addr %s986, 32
          %s988 = scalar_lea.vmem [#allocation2], %s987
          %989 = dma.done %s985, 512
        $region72: #{tpu_custom_call.1} parent=67 // pred_fallthru
          _
      $region68: #{tpu_custom_call.1} parent=5 // pred_fallthru
        _
    $region6: #{tpu_custom_call.1} parent=1 // loop_footer
      %s23 = sadd.s32 1, %s19
    $region7: #{tpu_custom_call.1} parent=1 // loop_footer_branch
      %18 = sbr.rel target = $region3
    $region8: #{tpu_custom_call.1} parent=1 // loop_exit
      _
    %990 = vsyncpa [#allocation3], 1
    %s991 = scalar_lea.sflag [#allocation3], 1
    %992 = vsyncpa %s991, 1

</llo_original>
